<compile_context>
chip_gen: v6e
topology: v6e:2x2x1
jax: 0.10.0
libtpu: 0.0.40
codegen_flags: <defaults>
</compile_context>

<pallas_src>
import jax
import jax.numpy as jnp
from jax.experimental import pallas as pl
from jax.experimental.pallas import tpu as pltpu

SURVIVAL_DISTRIBUTION_CONFIGS = {
    'ggd': (3, [1, 1, 1]), 'gamma': (2, [1, 1]), 'exponential': (1, [1]),
    'lnormal': (2, [1, 1]), 'weibull': (2, [1, 1]), 'rayleigh': (1, [1]),
    'chen2000': (2, [1, 1]), 'emwe': (4, [1, 1, 1, 1]), 'gompertz': (2, [1, 1]),
}

_SOFTPLUS_BETA = 100.0
_INV_SOFTPLUS_BETA = 1.0 / _SOFTPLUS_BETA
_SOFTPLUS_THRESHOLD = 20.0        # PyTorch softplus: beta*x > 20 -> identity

_TARGET_TILE_BYTES = 2 << 20      # ~2 MiB f32 tile; 8 MiB double-buffered in+out
_MAX_COL_BLOCK = 2048             # lane-dim block cap (multiple of 128)
_MIN_PALLAS_ELEMS = 16 * 1024     # below this, fused XLA beats kernel launch


def _softplus_delta(x, w, b):
    """softplus(w*x + b, beta=100) - x, with PyTorch threshold semantics."""
    y = x * w + b
    z = _SOFTPLUS_BETA * y
    safe_z = jnp.minimum(z, _SOFTPLUS_THRESHOLD)     # no overflow on untaken branch
    soft = jnp.where(z > _SOFTPLUS_THRESHOLD, y,
                     jnp.log1p(jnp.exp(safe_z)) * _INV_SOFTPLUS_BETA)
    return soft - x


def _delta_kernel(w_ref, b_ref, x_ref, o_ref):
    # w_ref, b_ref: (1, 1) SMEM scalars (nn.Linear(1,1) weight / bias)
    # x_ref, o_ref: (row_block, col_block) f32 VMEM tiles
    o_ref[...] = _softplus_delta(x_ref[...], w_ref[0, 0], b_ref[0, 0])


def _pick_blocks(B, T):
    """Pick (row_block, col_block) respecting the (8, 128) tiling constraint."""
    col_block = T if T <= _MAX_COL_BLOCK else _MAX_COL_BLOCK     # full-dim or x128
    target_rows = max(8, _TARGET_TILE_BYTES // (col_block * 4))
    if B <= target_rows:
        row_block = B                                            # full-dim block
    else:
        row_block = max(8, (target_rows // 8) * 8)               # multiple of 8
    return row_block, col_block


def _pallas_delta_2d(x2d, weight, bias):
    """softplus(w*x+b)-x over a (B, T) array — no pad/slice wrapper traffic."""
    B, T = x2d.shape
    rb, cb = _pick_blocks(B, T)
    grid = (pl.cdiv(B, rb), pl.cdiv(T, cb))   # partial edge blocks are masked
    n = B * T

    return pl.pallas_call(
        _delta_kernel,
        out_shape=jax.ShapeDtypeStruct((B, T), jnp.float32),
        grid=grid,
        in_specs=[
            pl.BlockSpec(memory_space=pltpu.SMEM),               # weight (1,1)
            pl.BlockSpec(memory_space=pltpu.SMEM),               # bias   (1,1)
            pl.BlockSpec((rb, cb), lambda i, j: (i, j)),         # x tiles
        ],
        out_specs=pl.BlockSpec((rb, cb), lambda i, j: (i, j)),
        compiler_params=pltpu.CompilerParams(
            dimension_semantics=("parallel", "parallel"),        # v7x: 2-TC shard
        ),
        cost_estimate=pl.CostEstimate(
            flops=7 * n,
            transcendentals=2 * n,
            bytes_accessed=8 * n,        # 4 B in + 4 B out per element, no padding
        ),
    )(weight.reshape(1, 1).astype(jnp.float32),
      bias.reshape(1, 1).astype(jnp.float32),
      x2d.astype(jnp.float32))


def linear_delta_ij_forward(cov_times, weight, bias,
                            deltas_fixed_to_zero=False, use_pallas=None):
    """Forward pass of LinearDeltaIJModelNumVisitsOnly.

    Args:
      cov_times: [B, T] float32 covariate times (batch.cov_times).
      weight:    [1, 1] float32 (nn.Linear(1,1).weight)
      bias:      [1]    float32 (nn.Linear(1,1).bias)
      use_pallas: None -> auto (Pallas only when B*T >= 16K); bool to force.

    Returns:
      pred_deltas:         [B, T, 1] float32
      hidden_states:       [B]       float32 (zeros)
      next_step_cov_preds: scalar int32 == B  (mirrors torch.tensor(shape[0]))
    """
    B, T = cov_times.shape
    if deltas_fixed_to_zero:
        # TODO(synk): PyTorch branch returns zeros of shape [B, 1] (shape quirk in
        # the original module); reproduced verbatim here without a kernel.
        pred_deltas = jnp.zeros((B, 1), dtype=jnp.float32)
    else:
        if use_pallas is None:
            use_pallas = (B * T) >= _MIN_PALLAS_ELEMS
        if use_pallas:
            out2d = _pallas_delta_2d(cov_times, weight, bias)
            pred_deltas = out2d[..., None]            # add back the Linear(1,1) dim
        else:
            # Tiny inputs: fused XLA elementwise beats the Pallas launch overhead.
            x = cov_times.astype(jnp.float32)
            pred_deltas = _softplus_delta(
                x,
                weight.reshape(()).astype(jnp.float32),
                bias.reshape(()).astype(jnp.float32),
            )[..., None]

    hidden_states = jnp.zeros((B,), dtype=jnp.float32)
    next_step_cov_preds = jnp.array(B, dtype=jnp.int32)
    return pred_deltas, hidden_states, next_step_cov_preds


def _reference_forward(cov_times, weight, bias):
    x = cov_times[..., None].astype(jnp.float32)      # [B, T, 1]
    return _softplus_delta(x, weight.reshape(1, 1, 1), bias.reshape(1, 1, 1))


if __name__ == "__main__":
    key = jax.random.PRNGKey(0)
    k_ct, k_w, k_b, k_gp, k_ct2 = jax.random.split(key, 5)

    B, T = 8, 256
    distribution_type = "ggd"

    # Deterministic "parameter init" (nn.Linear(1,1) + global_param_logspace)
    weight = jax.random.uniform(k_w, (1, 1), jnp.float32, -1.0, 1.0)
    bias = jax.random.uniform(k_b, (1,), jnp.float32, -1.0, 1.0)
    n_global = SURVIVAL_DISTRIBUTION_CONFIGS[distribution_type][0]
    global_param_logspace = jax.random.uniform(k_gp, (n_global,), jnp.float32)  # unused in forward

    # Synthetic batch.cov_times: non-negative visit times
    cov_times = jax.random.uniform(k_ct, (B, T), jnp.float32, 0.0, 5.0)

    # Exercise the Pallas path explicitly (demo shapes are below the auto threshold).
    pred_deltas, hidden_states, next_step_cov_preds = linear_delta_ij_forward(
        cov_times, weight, bias, use_pallas=True)
    jax.block_until_ready((pred_deltas, hidden_states, next_step_cov_preds))

    # Sanity-check against pure-JAX reference
    ref = _reference_forward(cov_times, weight, bias)
    assert pred_deltas.shape == (B, T, 1)
    assert hidden_states.shape == (B,)
    assert int(next_step_cov_preds) == B
    assert jnp.allclose(pred_deltas, ref, atol=1e-5, rtol=1e-5)

    # Auto-dispatch path (small size -> plain jnp) must agree with the kernel.
    auto_pred, _, _ = linear_delta_ij_forward(cov_times, weight, bias)
    assert jnp.allclose(auto_pred, pred_deltas, atol=1e-5, rtol=1e-5)

    # Ragged shape (not a multiple of the column block) exercises the
    # cdiv-grid / masked-edge path: T=2100 -> column blocks of 2048 + partial 52.
    B2, T2 = 16, 2100
    cov_times2 = jax.random.uniform(k_ct2, (B2, T2), jnp.float32, 0.0, 5.0)
    pred2, _, _ = linear_delta_ij_forward(cov_times2, weight, bias, use_pallas=True)
    jax.block_until_ready(pred2)
    ref2 = _reference_forward(cov_times2, weight, bias)
    assert pred2.shape == (B2, T2, 1)
    assert jnp.allclose(pred2, ref2, atol=1e-5, rtol=1e-5)

    print("KERNEL_OK")
</pallas_src>

<mosaic_0001>
module attributes {stable_mosaic.version = 11 : i64} {
  func.func @_delta_kernel(%arg0: i32, %arg1: i32, %arg2: memref<1x1xf32, #tpu.memory_space<smem>>, %arg3: memref<1x1xf32, #tpu.memory_space<smem>>, %arg4: memref<8x256xf32, #tpu.memory_space<vmem>>, %arg5: memref<8x256xf32, #tpu.memory_space<vmem>>) attributes {dimension_semantics = [#tpu.dimension_semantics<parallel>, #tpu.dimension_semantics<parallel>], iteration_bounds = array<i64: 1, 1>, scalar_prefetch = 0 : i64, scratch_operands = 0 : i64, tpu.core_type = #tpu.core_type<tc>, window_params = [{transform_indices = @transform_0, window_bounds = array<i64: 1, 1>}, {transform_indices = @transform_1, window_bounds = array<i64: 1, 1>}, {transform_indices = @transform_2, window_bounds = array<i64: 8, 256>}, {transform_indices = @transform_3, window_bounds = array<i64: 8, 256>}]} {
    %c0 = arith.constant 0 : index
    %c0_0 = arith.constant 0 : index
    %0 = vector.load %arg4[%c0, %c0_0] : memref<8x256xf32, #tpu.memory_space<vmem>>, vector<8x256xf32>
    %c0_1 = arith.constant 0 : index
    %c0_2 = arith.constant 0 : index
    %1 = memref.load %arg2[%c0_1, %c0_2] : memref<1x1xf32, #tpu.memory_space<smem>>
    %c0_3 = arith.constant 0 : index
    %c0_4 = arith.constant 0 : index
    %2 = memref.load %arg3[%c0_3, %c0_4] : memref<1x1xf32, #tpu.memory_space<smem>>
    %3 = vector.broadcast %1 : f32 to vector<8x256xf32>
    %4 = arith.mulf %0, %3 : vector<8x256xf32>
    %5 = vector.broadcast %2 : f32 to vector<8x256xf32>
    %6 = arith.addf %4, %5 : vector<8x256xf32>
    %cst = arith.constant 1.000000e+02 : f32
    %7 = vector.broadcast %cst : f32 to vector<8x256xf32>
    %8 = arith.mulf %7, %6 : vector<8x256xf32>
    %cst_5 = arith.constant 2.000000e+01 : f32
    %9 = vector.broadcast %cst_5 : f32 to vector<8x256xf32>
    %10 = arith.minimumf %8, %9 : vector<8x256xf32>
    %cst_6 = arith.constant 2.000000e+01 : f32
    %11 = vector.broadcast %cst_6 : f32 to vector<8x256xf32>
    %12 = arith.cmpf ogt, %8, %11 : vector<8x256xf32>
    %13 = math.exp %10 : vector<8x256xf32>
    %14 = math.log1p %13 : vector<8x256xf32>
    %cst_7 = arith.constant 0.00999999977 : f32
    %15 = vector.broadcast %cst_7 : f32 to vector<8x256xf32>
    %16 = arith.mulf %14, %15 : vector<8x256xf32>
    %17 = arith.select %12, %6, %16 : vector<8x256xi1>, vector<8x256xf32>
    %18 = arith.subf %17, %0 : vector<8x256xf32>
    %c0_8 = arith.constant 0 : index
    %c0_9 = arith.constant 0 : index
    %19 = vector.load %arg5[%c0_8, %c0_9] : memref<8x256xf32, #tpu.memory_space<vmem>>, vector<8x256xf32>
    tpu.vector_store %arg5[%c0_8, %c0_9], %18 {strides = array<i32>} : memref<8x256xf32, #tpu.memory_space<vmem>>, vector<8x256xf32>,
    return
  }
  func.func @transform_0(%arg0: i32, %arg1: i32) -> (i32, i32) {
    %c0_i32 = arith.constant 0 : i32
    %c0_i32_0 = arith.constant 0 : i32
    %c0_i32_1 = arith.constant 0 : i32
    return %c0_i32, %c0_i32_0 : i32, i32
  }
  func.func @transform_1(%arg0: i32, %arg1: i32) -> (i32, i32) {
    %c0_i32 = arith.constant 0 : i32
    %c0_i32_0 = arith.constant 0 : i32
    %c0_i32_1 = arith.constant 0 : i32
    return %c0_i32, %c0_i32_0 : i32, i32
  }
  func.func @transform_2(%arg0: i32, %arg1: i32) -> (i32, i32) {
    %c0_i32 = arith.constant 0 : i32
    return %arg0, %arg1 : i32, i32
  }
  func.func @transform_3(%arg0: i32, %arg1: i32) -> (i32, i32) {
    %c0_i32 = arith.constant 0 : i32
    return %arg0, %arg1 : i32, i32
  }
}

</mosaic_0001>

<llo_original>
// kernel: tpu_custom_call.1
$region0: #{tpu_custom_call.1}
  #allocation0 [shape = 'u32[]', space=smem, size = 0x4, offset = 0x4, fixed_abs, tag = 'smem constant byte address 0x4 - core index']
  #allocation1 [shape = 'u32[144,128]{1,0:T(1,128)}', space=vmem, size = 0x12000, scoped, tag = 'internal scratch']
  #allocation2 [shape = 'f32[1,1]{1,0:T(1,128)S(6)}', space=smem, size = 0x200, scoped, tag = 'scoped memory for tpu_custom_call.1']
  #allocation3 [shape = 'f32[1,1]{1,0:T(1,128)S(6)}', space=smem, size = 0x200, scoped, tag = 'scoped memory for tpu_custom_call.1']
  %s0 = inlined_call_operand.<no memory space> [shape: f32[1,1], index: 0, kind: input, shape index: {}]
  %s1 = inlined_call_operand.<no memory space> [shape: f32[1,1], index: 1, kind: input, shape index: {}]
  %s2 = inlined_call_operand.hbm [shape: f32[8,256], index: 2, kind: input, shape index: {}]
  %s3 = inlined_call_operand.hbm [shape: f32[8,256], index: 3, kind: output, shape index: {}]
  %s4 = sld [smem:[#allocation0]]
  $region26: #{tpu_custom_call.1} parent=0
    _
  %s6 = ssub.s32 1, %s4
  %s7 = scalar_select 0, %s6, %s4
  %8 = sst [smem:[#allocation2]] %s0
  %9 = sst [smem:[#allocation3]] %s1
  $region1: #{tpu_custom_call.1} parent=0
    #allocation4 [shape = 'u8[8192]{0}', space=vmem, size = 0x2000, scoped, tag = 'input window, operand 2, single buffered']
    #allocation5 [shape = 's32[1]{0}', space=sflag, size = 0x4, scoped, tag = 'scoped memory for tpu_custom_call.1']
    #allocation6 [shape = 's32[1]{0}', space=sflag, size = 0x4, scoped, tag = 'scoped memory for tpu_custom_call.1']
    #allocation7 [shape = 'u8[8192]{0}', space=vmem, size = 0x2000, scoped, tag = 'output window, operand 0, single buffered']
    %10 = vsyncpa [#allocation5], 0
    %11 = vsyncpa [#allocation6], 0
    // Predicated region
    $region2: #{tpu_custom_call.1} parent=1 // pred_check
      _
    $region3: #{tpu_custom_call.1} parent=1 // pred_check_branch
      %13 = sbr.rel (0) target = $region5
    $region4: #{tpu_custom_call.1} parent=1 // pred_region
      _
    $region5: #{tpu_custom_call.1} parent=1 // pred_fallthru
      _
    // Predicated region
    $region6: #{tpu_custom_call.1} parent=1 // pred_check
      _
    $region7: #{tpu_custom_call.1} parent=1 // pred_check_branch
      %15 = sbr.rel (0) target = $region9
    $region8: #{tpu_custom_call.1} parent=1 // pred_region
      _
    $region9: #{tpu_custom_call.1} parent=1 // pred_fallthru
      _
    // Predicated region
    $region10: #{tpu_custom_call.1} parent=1 // pred_check
      _
    $region11: #{tpu_custom_call.1} parent=1 // pred_check_branch
      %17 = sbr.rel (0) target = $region13
    $region12: #{tpu_custom_call.1} parent=1 // pred_region
      %s19 = ssub.s32 256, 256
      %20 = vsyncadd [#allocation5], %s19
      %s22 = sshll.u32 [#allocation4], 4
      %s23 = int_to_ptr.vmem [resolvable:$true] %s22
      %25 = dma.hbm_to_vmem [thread:$0]  %s2, 256, %s23, [#allocation5]
    $region13: #{tpu_custom_call.1} parent=1 // pred_fallthru
      _
    // Predicated region
    $region14: #{tpu_custom_call.1} parent=1 // pred_check
      _
    $region15: #{tpu_custom_call.1} parent=1 // pred_check_branch
      %27 = sbr.rel (0) target = $region17
    $region16: #{tpu_custom_call.1} parent=1 // pred_region
      %28 = dma.done [#allocation5], 256
    $region17: #{tpu_custom_call.1} parent=1 // pred_fallthru
      _
    %v29 = vld [vmem:[#allocation4] sm:$0xff]
    %v30 = vld [vmem:[#allocation4 + $0x8] sm:$0xff]
    %s31 = sld [smem:[#allocation2]]
    %s32 = sld [smem:[#allocation3]]
    %v33 = vstv %s31
    %v34 = vmul.f32 %v29, %v33
    %v35 = vmul.f32 %v30, %v33
    %v36 = vstv %s32
    %v37 = vadd.f32 %v34, %v36
    %v38 = vadd.f32 %v35, %v36
    %v39 = vmul.f32 %v37, 100.0
    %v40 = vmul.f32 %v38, 100.0
    %v41 = vmin.f32 %v39, 20.0
    %v42 = vmin.f32 %v40, 20.0
    %vm43 = vcmp.gt.f32.partialorder %v39, 20.0
    %vm44 = vcmp.gt.f32.partialorder %v40, 20.0
    %v45 = vmul.f32 %v41, 1.442695
    %v46 = vpow.pop %v45
    %v47 = vmul.f32 %v42, 1.442695
    %v48 = vpow.pop %v47
    %v49 = vadd.f32 %v46, 1.0
    %v50 = vlog2.pop %v49
    %v51 = vmul.f32 %v50, 0.6931472
    %v52 = vmul.f32 -0.5, %v46
    %v53 = vadd.f32 %v52, 1.0
    %v54 = vmul.f32 %v53, %v46
    %v55 = vand.u32 2147483647, %v46
    %vm56 = vcmp.lt.f32.partialorder %v55, 0.0004427343
    %v57 = vsel %vm56, %v54, %v51
    %v58 = vadd.f32 %v48, 1.0
    %v59 = vlog2.pop %v58
    %v60 = vmul.f32 %v59, 0.6931472
    %v61 = vmul.f32 -0.5, %v48
    %v62 = vadd.f32 %v61, 1.0
    %v63 = vmul.f32 %v62, %v48
    %v64 = vand.u32 2147483647, %v48
    %vm65 = vcmp.lt.f32.partialorder %v64, 0.0004427343
    %v66 = vsel %vm65, %v63, %v60
    %v67 = vmul.f32 %v57, 0.01
    %v68 = vmul.f32 %v66, 0.01
    %v69 = vsel %vm43, %v37, %v67
    %v70 = vsel %vm44, %v38, %v68
    %v71 = vsub.f32 %v69, %v29
    %v72 = vsub.f32 %v70, %v30
    %73 = vst [vmem:[#allocation7] sm:$0xff] %v71
    %74 = vst [vmem:[#allocation7 + $0x8] sm:$0xff] %v72
    // Predicated region
    $region18: #{tpu_custom_call.1} parent=1 // pred_check
      _
    $region19: #{tpu_custom_call.1} parent=1 // pred_check_branch
      %76 = sbr.rel (0) target = $region21
    $region20: #{tpu_custom_call.1} parent=1 // pred_region
      %s78 = ssub.s32 256, 256
      %79 = vsyncadd [#allocation6], %s78
      %s81 = sshll.u32 [#allocation7], 4
      %s82 = int_to_ptr.vmem [resolvable:$true] %s81
      %84 = dma.vmem_to_hbm [thread:$0]  %s82, 256, %s3, [#allocation6]
    $region21: #{tpu_custom_call.1} parent=1 // pred_fallthru
      _
    // Predicated region
    $region22: #{tpu_custom_call.1} parent=1 // pred_check
      _
    $region23: #{tpu_custom_call.1} parent=1 // pred_check_branch
      %86 = sbr.rel (0) target = $region25
    $region24: #{tpu_custom_call.1} parent=1 // pred_region
      %87 = dma.done [#allocation6], 256
    $region25: #{tpu_custom_call.1} parent=1 // pred_fallthru
      _
    %88 = vsyncpa [#allocation5], 1
    %89 = vsyncpa [#allocation6], 1

</llo_original>
